<compile_context>
chip_gen: v7x
topology: tpu7x:2x2x1
jax: 0.10.0
libtpu: 0.0.40
codegen_flags: <defaults>
</compile_context>

<pallas_src>
import functools

import jax
import jax.numpy as jnp
from jax import lax
from jax.experimental import pallas as pl
from jax.experimental.pallas import tpu as pltpu


def _round_up(x, m):
    return (x + m - 1) // m * m


def _fused_kernel(xT_ref, wT_ref, g_ref, b_ref, o_ref, sum_ref, ssq_ref,
                  *, inv_rows, eps):
    """Fused conv (single MXU matmul) + folded training-mode BN + ReLU.

    Grid = (phase, row_tile):
      phase 0: accumulate per-channel sum / sum-of-squares of the conv output.
      phase 1: recompute conv tile, apply folded BN scale/shift + ReLU, store.
    """
    phase = pl.program_id(0)
    tile = pl.program_id(1)

    # One lane-dense matmul: (Cout, Kdim) @ (Kdim, TM) -> (Cout, TM), f32 acc.
    acc = jnp.dot(wT_ref[...], xT_ref[...], preferred_element_type=jnp.float32)

    @pl.when((phase == 0) & (tile == 0))
    def _init():
        sum_ref[...] = jnp.zeros_like(sum_ref)
        ssq_ref[...] = jnp.zeros_like(ssq_ref)

    @pl.when(phase == 0)
    def _stats():
        sum_ref[...] += jnp.sum(acc, axis=1, keepdims=True)        # (Cout, 1)
        ssq_ref[...] += jnp.sum(acc * acc, axis=1, keepdims=True)  # (Cout, 1)
        # Keep the output buffer defined; overwritten by phase 1.
        o_ref[...] = acc.astype(o_ref.dtype)

    @pl.when(phase == 1)
    def _finalize():
        mean = sum_ref[...] * inv_rows                      # (Cout, 1)
        var = ssq_ref[...] * inv_rows - mean * mean         # biased batch variance
        scale = g_ref[...] * lax.rsqrt(var + eps)           # folded BN scale
        shift = b_ref[...] - mean * scale                   # folded BN shift
        o_ref[...] = jnp.maximum(acc * scale + shift, 0.0).astype(o_ref.dtype)


def conv_relu_bn_dropout(x_nchw, w_oihw, bias, gamma, beta, *,
                         stride=1, padding=1, eps=1e-5,
                         dropout_p=0.0, matmul_dtype=jnp.bfloat16):
    assert stride == 1, "module default stride=1 is what this kernel implements"
    N, Cin, H, W = x_nchw.shape
    Cout, Cin_w, KH, KW = w_oihw.shape
    assert Cin == Cin_w

    Ho = H + 2 * padding - KH + 1
    Wo = W + 2 * padding - KW + 1
    rows = N * Ho * Wo
    Kdim = KH * KW * Cin

    # ---- glue (plain JAX): NCHW -> padded NHWC -> transposed im2col (Kdim, rows)
    x_nhwc = jnp.transpose(x_nchw, (0, 2, 3, 1)).astype(jnp.float32)
    xp = jnp.pad(x_nhwc, ((0, 0), (padding, padding), (padding, padding), (0, 0)))
    cols = []
    for kh in range(KH):
        for kw in range(KW):
            cols.append(xp[:, kh:kh + Ho, kw:kw + Wo, :])            # (N,Ho,Wo,Cin)
    # (KH*KW, N, Ho, Wo, Cin) -> (KH*KW, Cin, N, Ho, Wo) -> (Kdim, rows)
    patchT = jnp.stack(cols, axis=0).transpose(0, 4, 1, 2, 3).reshape(Kdim, rows)

    # Weight OIHW -> (Cout, KH, KW, Cin) -> (Cout, Kdim); K ordering matches patchT.
    wT = jnp.transpose(w_oihw, (0, 2, 3, 1)).reshape(Cout, Kdim)

    # Row tiling: lane-dense tiles of TM columns. Zero-padded columns contribute
    # zero to the BN sums (the conv bias is not added in the kernel), so stats
    # computed with the true `rows` divisor stay exact.
    TM = min(512, _round_up(rows, 128))
    rows_p = _round_up(rows, TM)
    n_tiles = rows_p // TM
    patchT = jnp.pad(patchT, ((0, 0), (0, rows_p - rows)))

    # bf16 operands halve DMA bytes and double MXU throughput; accumulation is f32.
    patchT = patchT.astype(matmul_dtype)
    wT = wT.astype(matmul_dtype)

    g2 = gamma.reshape(Cout, 1).astype(jnp.float32)
    b2 = beta.reshape(Cout, 1).astype(jnp.float32)
    # NOTE: Conv2d bias is mathematically canceled by the training-mode BatchNorm
    # that follows (the batch mean absorbs any per-channel constant), so it is
    # intentionally not passed to the kernel (dead compute + a redundant operand).

    kernel = functools.partial(_fused_kernel, inv_rows=1.0 / rows, eps=float(eps))

    out_cr = pl.pallas_call(
        kernel,
        out_shape=jax.ShapeDtypeStruct((Cout, rows_p), jnp.float32),
        grid=(2, n_tiles),  # axis 0: phase (0=stats, 1=normalize); axis 1: row tiles
        in_specs=[
            pl.BlockSpec((Kdim, TM), lambda p, t: (0, t)),     # im2col^T tile
            pl.BlockSpec((Cout, Kdim), lambda p, t: (0, 0)),   # weight (resident)
            pl.BlockSpec((Cout, 1), lambda p, t: (0, 0)),      # gamma
            pl.BlockSpec((Cout, 1), lambda p, t: (0, 0)),      # beta
        ],
        out_specs=pl.BlockSpec((Cout, TM), lambda p, t: (0, t)),
        scratch_shapes=[
            pltpu.VMEM((Cout, 1), jnp.float32),   # per-channel sum
            pltpu.VMEM((Cout, 1), jnp.float32),   # per-channel sum of squares
        ],
        compiler_params=pltpu.CompilerParams(
            # Both axes sequential: phase 1 needs stats accumulated over ALL row
            # tiles (BN uses full-batch statistics). A multi-TensorCore split
            # would use two pallas_calls (stats, then a 'parallel' normalize).
            dimension_semantics=("arbitrary", "arbitrary"),
            vmem_limit_bytes=32 * 1024 * 1024,
        ),
    )(patchT, wT, g2, b2)

    # TODO(synk): nn.Dropout(p) training-mode mask (scaled by 1/(1-p)) is applied as
    # identity (eval semantics) because PyTorch's RNG stream cannot be matched; a
    # non-matching stochastic mask could be added with pltpu.prng_seed/prng_random_bits.
    del dropout_p, bias

    out_cr = out_cr[:, :rows]                                        # strip row padding
    out = out_cr.reshape(Cout, N, Ho, Wo).transpose(1, 0, 2, 3)       # -> NCHW
    return out


def _reference(x_nchw, w_oihw, bias, gamma, beta, *, padding=1, eps=1e-5,
               conv_dtype=jnp.float32):
    """Pure-JAX reference mirroring the PyTorch training-mode forward (dropout=id)."""
    x = jnp.transpose(x_nchw, (0, 2, 3, 1)).astype(conv_dtype)
    w = jnp.transpose(w_oihw, (2, 3, 1, 0)).astype(conv_dtype)
    conv = lax.conv_general_dilated(
        x, w, window_strides=(1, 1),
        padding=[(padding, padding), (padding, padding)],
        dimension_numbers=("NHWC", "HWIO", "NHWC"),
        preferred_element_type=jnp.float32,
    ) + bias.reshape(1, 1, 1, -1).astype(jnp.float32)
    mean = jnp.mean(conv, axis=(0, 1, 2), keepdims=True)
    var = jnp.mean((conv - mean) ** 2, axis=(0, 1, 2), keepdims=True)
    y = (conv - mean) * lax.rsqrt(var + eps)
    y = y * gamma.reshape(1, 1, 1, -1) + beta.reshape(1, 1, 1, -1)
    y = jnp.maximum(y, 0.0)
    return jnp.transpose(y, (0, 3, 1, 2))


if __name__ == "__main__":
    # Module config (small, consistent with the PyTorch block)
    N, Cin, H, W = 2, 4, 16, 16
    Cout, K = 8, 3
    dropout_p = 0.1  # identity in this implementation (see TODO above)

    key = jax.random.PRNGKey(0)
    kx, kw, kb = jax.random.split(key, 3)

    x = jax.random.normal(kx, (N, Cin, H, W), jnp.float32)           # NCHW input
    w = jax.random.normal(kw, (Cout, Cin, K, K), jnp.float32) * 0.1  # Conv2d weight (OIHW)
    b = jax.random.normal(kb, (Cout,), jnp.float32) * 0.1            # Conv2d bias
    gamma = jnp.ones((Cout,), jnp.float32)                           # BatchNorm2d.weight init
    beta = jnp.zeros((Cout,), jnp.float32)                           # BatchNorm2d.bias init

    out = conv_relu_bn_dropout(x, w, b, gamma, beta, padding=1, dropout_p=dropout_p)
    out = jax.block_until_ready(out)
    assert out.shape == (N, Cout, H, W), out.shape

    # Matched-precision reference (conv inputs in bf16, f32 accumulation): tight check.
    ref_bf16 = _reference(x, w, b, gamma, beta, padding=1, conv_dtype=jnp.bfloat16)
    err = float(jnp.max(jnp.abs(out - ref_bf16)))
    assert jnp.allclose(out, ref_bf16, atol=1e-3, rtol=1e-3), err

    # Full-f32 reference: loose check (bf16 matmul inputs introduce ~0.5% conv error).
    ref_f32 = _reference(x, w, b, gamma, beta, padding=1, conv_dtype=jnp.float32)
    err32 = float(jnp.max(jnp.abs(out - ref_f32)))
    assert jnp.allclose(out, ref_f32, atol=5e-2, rtol=5e-2), err32

    print("KERNEL_OK")
</pallas_src>

<mosaic_0001>
module attributes {stable_mosaic.version = 11 : i64} {
  func.func @_fused_kernel(%arg0: i32, %arg1: i32, %arg2: memref<36x512xbf16, #tpu.memory_space<vmem>>, %arg3: memref<8x36xbf16, #tpu.memory_space<vmem>>, %arg4: memref<8x1xf32, #tpu.memory_space<vmem>>, %arg5: memref<8x1xf32, #tpu.memory_space<vmem>>, %arg6: memref<8x512xf32, #tpu.memory_space<vmem>>, %arg7: memref<8x1xf32, #tpu.memory_space<vmem>>, %arg8: memref<8x1xf32, #tpu.memory_space<vmem>>) attributes {dimension_semantics = [#tpu.dimension_semantics<arbitrary>, #tpu.dimension_semantics<arbitrary>], iteration_bounds = array<i64: 2, 1>, scalar_prefetch = 0 : i64, scratch_operands = 2 : i64, tpu.core_type = #tpu.core_type<tc>, window_params = [{transform_indices = @transform_0, window_bounds = array<i64: 36, 512>}, {pipeline_mode = #tpu.pipeline_mode<synchronous>, transform_indices = @transform_1, window_bounds = array<i64: 8, 36>}, {pipeline_mode = #tpu.pipeline_mode<synchronous>, transform_indices = @transform_2, window_bounds = array<i64: 8, 1>}, {pipeline_mode = #tpu.pipeline_mode<synchronous>, transform_indices = @transform_3, window_bounds = array<i64: 8, 1>}, {transform_indices = @transform_4, window_bounds = array<i64: 8, 512>}]} {
    %c0 = arith.constant 0 : index
    %c0_0 = arith.constant 0 : index
    %0 = vector.load %arg3[%c0, %c0_0] : memref<8x36xbf16, #tpu.memory_space<vmem>>, vector<8x36xbf16>
    %c0_1 = arith.constant 0 : index
    %c0_2 = arith.constant 0 : index
    %1 = vector.load %arg2[%c0_1, %c0_2] : memref<36x512xbf16, #tpu.memory_space<vmem>>, vector<36x512xbf16>
    %cst = arith.constant dense<0.000000e+00> : vector<8x512xf32>
    %2 = tpu.matmul %0, %1, %cst {dimension_numbers = #tpu.dot_dimension_numbers<[1], [0], [0], [1], [0, 0, 1, 1], [], []>} : vector<8x36xbf16>, vector<36x512xbf16>, vector<8x512xf32> -> vector<8x512xf32>
    %c0_i32 = arith.constant 0 : i32
    %3 = arith.cmpi eq, %arg0, %c0_i32 : i32
    %c0_i32_3 = arith.constant 0 : i32
    %4 = arith.cmpi eq, %arg1, %c0_i32_3 : i32
    %5 = arith.andi %3, %4 : i1
    %6 = arith.extui %5 : i1 to i32
    %c0_i32_4 = arith.constant 0 : i32
    %7 = arith.cmpi ne, %6, %c0_i32_4 : i32
    scf.if %7 {
      %cst_8 = arith.constant 0.000000e+00 : f32
      %14 = vector.broadcast %cst_8 : f32 to vector<8x1xf32>
      %c0_9 = arith.constant 0 : index
      %c0_10 = arith.constant 0 : index
      %15 = vector.load %arg7[%c0_9, %c0_10] : memref<8x1xf32, #tpu.memory_space<vmem>>, vector<8x1xf32>
      tpu.vector_store %arg7[%c0_9, %c0_10], %14 {strides = array<i32>} : memref<8x1xf32, #tpu.memory_space<vmem>>, vector<8x1xf32>,
      %cst_11 = arith.constant 0.000000e+00 : f32
      %16 = vector.broadcast %cst_11 : f32 to vector<8x1xf32>
      %c0_12 = arith.constant 0 : index
      %c0_13 = arith.constant 0 : index
      %17 = vector.load %arg8[%c0_12, %c0_13] : memref<8x1xf32, #tpu.memory_space<vmem>>, vector<8x1xf32>
      tpu.vector_store %arg8[%c0_12, %c0_13], %16 {strides = array<i32>} : memref<8x1xf32, #tpu.memory_space<vmem>>, vector<8x1xf32>,
    } else {
    }
    %c0_i32_5 = arith.constant 0 : i32
    %8 = arith.cmpi eq, %arg0, %c0_i32_5 : i32
    %9 = arith.extui %8 : i1 to i32
    %c0_i32_6 = arith.constant 0 : i32
    %10 = arith.cmpi ne, %9, %c0_i32_6 : i32
    scf.if %10 {
      %c0_8 = arith.constant 0 : index
      %c0_9 = arith.constant 0 : index
      %14 = vector.load %arg7[%c0_8, %c0_9] : memref<8x1xf32, #tpu.memory_space<vmem>>, vector<8x1xf32>
      %cst_10 = arith.constant dense<0.000000e+00> : vector<8xf32>
      %15 = vector.multi_reduction <add>, %2, %cst_10 [1] : vector<8x512xf32> to vector<8xf32>
      %16 = vector.shape_cast %15 : vector<8xf32> to vector<8x1xf32>
      %17 = arith.addf %14, %16 : vector<8x1xf32>
      %c0_11 = arith.constant 0 : index
      %c0_12 = arith.constant 0 : index
      %18 = vector.load %arg7[%c0_11, %c0_12] : memref<8x1xf32, #tpu.memory_space<vmem>>, vector<8x1xf32>
      tpu.vector_store %arg7[%c0_11, %c0_12], %17 {strides = array<i32>} : memref<8x1xf32, #tpu.memory_space<vmem>>, vector<8x1xf32>,
      %c0_13 = arith.constant 0 : index
      %c0_14 = arith.constant 0 : index
      %19 = vector.load %arg8[%c0_13, %c0_14] : memref<8x1xf32, #tpu.memory_space<vmem>>, vector<8x1xf32>
      %20 = arith.mulf %2, %2 : vector<8x512xf32>
      %cst_15 = arith.constant dense<0.000000e+00> : vector<8xf32>
      %21 = vector.multi_reduction <add>, %20, %cst_15 [1] : vector<8x512xf32> to vector<8xf32>
      %22 = vector.shape_cast %21 : vector<8xf32> to vector<8x1xf32>
      %23 = arith.addf %19, %22 : vector<8x1xf32>
      %c0_16 = arith.constant 0 : index
      %c0_17 = arith.constant 0 : index
      %24 = vector.load %arg8[%c0_16, %c0_17] : memref<8x1xf32, #tpu.memory_space<vmem>>, vector<8x1xf32>
      tpu.vector_store %arg8[%c0_16, %c0_17], %23 {strides = array<i32>} : memref<8x1xf32, #tpu.memory_space<vmem>>, vector<8x1xf32>,
      %c0_18 = arith.constant 0 : index
      %c0_19 = arith.constant 0 : index
      %25 = vector.load %arg6[%c0_18, %c0_19] : memref<8x512xf32, #tpu.memory_space<vmem>>, vector<8x512xf32>
      tpu.vector_store %arg6[%c0_18, %c0_19], %2 {strides = array<i32>} : memref<8x512xf32, #tpu.memory_space<vmem>>, vector<8x512xf32>,
    } else {
    }
    %c1_i32 = arith.constant 1 : i32
    %11 = arith.cmpi eq, %arg0, %c1_i32 : i32
    %12 = arith.extui %11 : i1 to i32
    %c0_i32_7 = arith.constant 0 : i32
    %13 = arith.cmpi ne, %12, %c0_i32_7 : i32
    scf.if %13 {
      %c0_8 = arith.constant 0 : index
      %c0_9 = arith.constant 0 : index
      %14 = vector.load %arg7[%c0_8, %c0_9] : memref<8x1xf32, #tpu.memory_space<vmem>>, vector<8x1xf32>
      %cst_10 = arith.constant 0.001953125 : f32
      %15 = vector.broadcast %cst_10 : f32 to vector<8x1xf32>
      %16 = arith.mulf %14, %15 : vector<8x1xf32>
      %c0_11 = arith.constant 0 : index
      %c0_12 = arith.constant 0 : index
      %17 = vector.load %arg8[%c0_11, %c0_12] : memref<8x1xf32, #tpu.memory_space<vmem>>, vector<8x1xf32>
      %cst_13 = arith.constant 0.001953125 : f32
      %18 = vector.broadcast %cst_13 : f32 to vector<8x1xf32>
      %19 = arith.mulf %17, %18 : vector<8x1xf32>
      %20 = arith.mulf %16, %16 : vector<8x1xf32>
      %21 = arith.subf %19, %20 : vector<8x1xf32>
      %c0_14 = arith.constant 0 : index
      %c0_15 = arith.constant 0 : index
      %22 = vector.load %arg4[%c0_14, %c0_15] : memref<8x1xf32, #tpu.memory_space<vmem>>, vector<8x1xf32>
      %cst_16 = arith.constant 9.99999974E-6 : f32
      %23 = vector.broadcast %cst_16 : f32 to vector<8x1xf32>
      %24 = arith.addf %21, %23 : vector<8x1xf32>
      %25 = math.rsqrt %24 : vector<8x1xf32>
      %26 = arith.mulf %22, %25 : vector<8x1xf32>
      %c0_17 = arith.constant 0 : index
      %c0_18 = arith.constant 0 : index
      %27 = vector.load %arg5[%c0_17, %c0_18] : memref<8x1xf32, #tpu.memory_space<vmem>>, vector<8x1xf32>
      %28 = arith.mulf %16, %26 : vector<8x1xf32>
      %29 = arith.subf %27, %28 : vector<8x1xf32>
      %30 = vector.broadcast %26 : vector<8x1xf32> to vector<8x512xf32>
      %31 = arith.mulf %2, %30 : vector<8x512xf32>
      %32 = vector.broadcast %29 : vector<8x1xf32> to vector<8x512xf32>
      %33 = arith.addf %31, %32 : vector<8x512xf32>
      %cst_19 = arith.constant 0.000000e+00 : f32
      %34 = vector.broadcast %cst_19 : f32 to vector<8x512xf32>
      %35 = arith.maximumf %33, %34 : vector<8x512xf32>
      %c0_20 = arith.constant 0 : index
      %c0_21 = arith.constant 0 : index
      %36 = vector.load %arg6[%c0_20, %c0_21] : memref<8x512xf32, #tpu.memory_space<vmem>>, vector<8x512xf32>
      tpu.vector_store %arg6[%c0_20, %c0_21], %35 {strides = array<i32>} : memref<8x512xf32, #tpu.memory_space<vmem>>, vector<8x512xf32>,
    } else {
    }
    return
  }
  func.func @transform_0(%arg0: i32, %arg1: i32) -> (i32, i32) {
    %c0_i32 = arith.constant 0 : i32
    %c0_i32_0 = arith.constant 0 : i32
    return %c0_i32, %arg1 : i32, i32
  }
  func.func @transform_1(%arg0: i32, %arg1: i32) -> (i32, i32) {
    %c0_i32 = arith.constant 0 : i32
    %c0_i32_0 = arith.constant 0 : i32
    %c0_i32_1 = arith.constant 0 : i32
    return %c0_i32, %c0_i32_0 : i32, i32
  }
  func.func @transform_2(%arg0: i32, %arg1: i32) -> (i32, i32) {
    %c0_i32 = arith.constant 0 : i32
    %c0_i32_0 = arith.constant 0 : i32
    %c0_i32_1 = arith.constant 0 : i32
    return %c0_i32, %c0_i32_0 : i32, i32
  }
  func.func @transform_3(%arg0: i32, %arg1: i32) -> (i32, i32) {
    %c0_i32 = arith.constant 0 : i32
    %c0_i32_0 = arith.constant 0 : i32
    %c0_i32_1 = arith.constant 0 : i32
    return %c0_i32, %c0_i32_0 : i32, i32
  }
  func.func @transform_4(%arg0: i32, %arg1: i32) -> (i32, i32) {
    %c0_i32 = arith.constant 0 : i32
    %c0_i32_0 = arith.constant 0 : i32
    return %c0_i32, %arg1 : i32, i32
  }
}

</mosaic_0001>

<llo_original>
// kernel: tpu_custom_call.1
$region0: #{tpu_custom_call.1}
  #allocation0 [shape = 'u32[]', space=smem, size = 0x4, offset = 0x4, fixed_abs, tag = 'smem constant byte address 0x4 - core index']
  #allocation1 [shape = 'u32[144,128]{1,0:T(1,128)}', space=vmem, size = 0x12000, scoped, tag = 'internal scratch']
  #allocation2 [shape = 'f32[8,1]{1,0:T(8,128)}', space=vmem, size = 0x1000, scoped, tag = 'scratch operand']
  #allocation3 [shape = 'f32[8,1]{1,0:T(8,128)}', space=vmem, size = 0x1000, scoped, tag = 'scratch operand']
  %s0 = inlined_call_operand.hbm [shape: bf16[36,512], index: 0, kind: input, shape index: {}]
  %s1 = inlined_call_operand.vmem [shape: bf16[8,36], index: 1, kind: input, shape index: {}]
  %s2 = inlined_call_operand.vmem [shape: f32[8,1], index: 2, kind: input, shape index: {}]
  %s3 = inlined_call_operand.vmem [shape: f32[8,1], index: 3, kind: input, shape index: {}]
  %s4 = inlined_call_operand.hbm [shape: f32[8,512], index: 4, kind: output, shape index: {}]
  %s5 = sld [smem:[#allocation0]]
  $region65: #{tpu_custom_call.1} parent=0
    _
  %s7 = ssub.s32 1, %s5
  %s8 = scalar_select 0, %s7, %s5
  $region1: #{tpu_custom_call.1} parent=0
    #allocation4 [shape = 'u8[40960]{0}', space=vmem, size = 0xa000, scoped, tag = 'input window, operand 0, single buffered']
    #allocation5 [shape = 's32[2]{0}', space=sflag, size = 0x8, scoped, tag = 'scoped memory for tpu_custom_call.1']
    #allocation6 [shape = 's32[2]{0}', space=sflag, size = 0x8, scoped, tag = 'scoped memory for tpu_custom_call.1']
    #allocation7 [shape = 'u8[16384]{0}', space=vmem, size = 0x4000, scoped, tag = 'output window, operand 0, single buffered']
    %9 = vsyncpa [#allocation5], 0
    %10 = vsyncpa [#allocation6], 0
    loop: start=0, step=1, limit=4
    $region2: #{tpu_custom_call.1} parent=1 // loop_pre_header
      _
    $region3: #{tpu_custom_call.1} parent=1 // loop_header
      %s12 = sphi 0, %s16
      %p13 = scmp.ge.s32.totalorder %s12, 4
      %s19 = sphi 0, %s31
      %s20 = sphi 0, %s27
      %s21 = sphi 0, %s19
      %s22 = sphi 0, %s20
      %s23 = sphi 0, %s21
      %s24 = sphi 0, %s22
      %s34 = sphi 0, %s36
      %s37 = sphi 0, %s34
      %s38 = sphi 0, %s37
      %s54 = sphi 0, %s38
      %s58 = sphi 0, %s58
      %s60 = sphi 0, %s58
      %s61 = sphi 0, %s60
      %s75 = sphi 0, %s61
      %s79 = sphi 0, %s79
      %s81 = sphi 0, %s79
      %s82 = sphi 0, %s81
      %s96 = sphi 0, %s82
      %s100 = sphi 0, %s100
      %s102 = sphi 0, %s100
      %s103 = sphi 0, %s102
      %s117 = sphi 0, %s103
      %s123 = sphi 0, %s125
      %s126 = sphi 0, %s123
      %s127 = sphi 0, %s126
      %s143 = sphi 0, %s127
    $region4: #{tpu_custom_call.1} parent=1 // loop_header_branch
      %15 = sbr.rel (%p13) target = $region8
    $region5: #{tpu_custom_call.1} parent=1 // loop_body
      %s17 = ssub.s32 %s12, 1
      %s18 = ssub.s32 %s12, 2
      %s25 = sadd.s32 1, %s20
      %p26 = scmp.ge.s32.totalorder %s25, 1
      %s27 = scalar_select %p26, 0, %s25
      %s28 = sadd.s32 1, %s19
      %s29 = scalar_select %p26, %s28, %s19
      %p30 = scmp.ge.s32.totalorder %s29, 2
      %s31 = scalar_select %p30, 0, %s29
      %s32 = ssub.s32 %s20, %s27
      %p33 = scmp.eq.s32.totalorder %s32, 0
      %s35 = sadd.s32 %s34, 1
      %s36 = scalar_select %p33, %s34, %s35
      %p39 = pneg %p33
      %p40 = scmp.eq.s32.totalorder %s12, 1
      %p41 = por %p39, %p40
      %p42 = scmp.ne.s32.totalorder %s34, %s37
      %p43 = scmp.eq.s32.totalorder %s12, 0
      %p44 = por %p42, %p43
      %p45 = scmp.ne.s32.totalorder %s34, %s37
      %p46 = scmp.eq.s32.totalorder %s17, 1
      %p47 = por %p45, %p46
      %p48 = scmp.ne.s32.totalorder %s37, %s38
      %p49 = scmp.eq.s32.totalorder %s17, 0
      %p50 = por %p48, %p49
      %p51 = scmp.ne.s32.totalorder %s37, %s38
      %p52 = scmp.eq.s32.totalorder %s18, 1
      %p53 = por %p51, %p52
      %p55 = scmp.ne.s32.totalorder %s38, %s54
      %p56 = scmp.eq.s32.totalorder %s18, 0
      %p57 = por %p55, %p56
      %s59 = sadd.s32 %s58, 1
      %p62 = scmp.eq.s32.totalorder %s12, 1
      %p63 = scmp.ne.s32.totalorder %s58, %s60
      %p64 = scmp.eq.s32.totalorder %s12, 0
      %p65 = por %p63, %p64
      %p66 = scmp.ne.s32.totalorder %s58, %s60
      %p67 = scmp.eq.s32.totalorder %s17, 1
      %p68 = por %p66, %p67
      %p69 = scmp.ne.s32.totalorder %s60, %s61
      %p70 = scmp.eq.s32.totalorder %s17, 0
      %p71 = por %p69, %p70
      %p72 = scmp.ne.s32.totalorder %s60, %s61
      %p73 = scmp.eq.s32.totalorder %s18, 1
      %p74 = por %p72, %p73
      %p76 = scmp.ne.s32.totalorder %s61, %s75
      %p77 = scmp.eq.s32.totalorder %s18, 0
      %p78 = por %p76, %p77
      %s80 = sadd.s32 %s79, 1
      %p83 = scmp.eq.s32.totalorder %s12, 1
      %p84 = scmp.ne.s32.totalorder %s79, %s81
      %p85 = scmp.eq.s32.totalorder %s12, 0
      %p86 = por %p84, %p85
      %p87 = scmp.ne.s32.totalorder %s79, %s81
      %p88 = scmp.eq.s32.totalorder %s17, 1
      %p89 = por %p87, %p88
      %p90 = scmp.ne.s32.totalorder %s81, %s82
      %p91 = scmp.eq.s32.totalorder %s17, 0
      %p92 = por %p90, %p91
      %p93 = scmp.ne.s32.totalorder %s81, %s82
      %p94 = scmp.eq.s32.totalorder %s18, 1
      %p95 = por %p93, %p94
      %p97 = scmp.ne.s32.totalorder %s82, %s96
      %p98 = scmp.eq.s32.totalorder %s18, 0
      %p99 = por %p97, %p98
      %s101 = sadd.s32 %s100, 1
      %p104 = scmp.eq.s32.totalorder %s12, 1
      %p105 = scmp.ne.s32.totalorder %s100, %s102
      %p106 = scmp.eq.s32.totalorder %s12, 0
      %p107 = por %p105, %p106
      %p108 = scmp.ne.s32.totalorder %s100, %s102
      %p109 = scmp.eq.s32.totalorder %s17, 1
      %p110 = por %p108, %p109
      %p111 = scmp.ne.s32.totalorder %s102, %s103
      %p112 = scmp.eq.s32.totalorder %s17, 0
      %p113 = por %p111, %p112
      %p114 = scmp.ne.s32.totalorder %s102, %s103
      %p115 = scmp.eq.s32.totalorder %s18, 1
      %p116 = por %p114, %p115
      %p118 = scmp.ne.s32.totalorder %s103, %s117
      %p119 = scmp.eq.s32.totalorder %s18, 0
      %p120 = por %p118, %p119
      %s121 = ssub.s32 %s20, %s27
      %p122 = scmp.eq.s32.totalorder %s121, 0
      %s124 = sadd.s32 %s123, 1
      %s125 = scalar_select %p122, %s123, %s124
      %p128 = pneg %p122
      %p129 = scmp.eq.s32.totalorder %s12, 1
      %p130 = por %p128, %p129
      %p131 = scmp.ne.s32.totalorder %s123, %s126
      %p132 = scmp.eq.s32.totalorder %s12, 0
      %p133 = por %p131, %p132
      %p134 = scmp.ne.s32.totalorder %s123, %s126
      %p135 = scmp.eq.s32.totalorder %s17, 1
      %p136 = por %p134, %p135
      %p137 = scmp.ne.s32.totalorder %s126, %s127
      %p138 = scmp.eq.s32.totalorder %s17, 0
      %p139 = por %p137, %p138
      %p140 = scmp.ne.s32.totalorder %s126, %s127
      %p141 = scmp.eq.s32.totalorder %s18, 1
      %p142 = por %p140, %p141
      %p144 = scmp.ne.s32.totalorder %s127, %s143
      %p145 = scmp.eq.s32.totalorder %s18, 0
      %p146 = por %p144, %p145
      %p147 = scmp.le.s32.totalorder 1, %s12
      %p148 = scmp.lt.s32.totalorder %s12, 3
      %p149 = pnand %p147, %p148
      %p150 = pneg %p149
      // Predicated region
      $region9: #{tpu_custom_call.1} parent=5 // pred_check
        _
      $region10: #{tpu_custom_call.1} parent=5 // pred_check_branch
        %152 = sbr.rel (%p149) target = $region12
      $region11: #{tpu_custom_call.1} parent=5 // pred_region
        %s153 = ssub.s32 %s12, 1
        // Predicated region
        $region13: #{tpu_custom_call.1} parent=11 // pred_check
          %p154 = pneg %p50
        $region14: #{tpu_custom_call.1} parent=11 // pred_check_branch
          %156 = sbr.rel (%p154) target = $region16
        $region15: #{tpu_custom_call.1} parent=11 // pred_region
          %s157 = smul.u32 4, %s22
          %s159 = ssub.s32 1280, 1280
          %160 = vsyncadd [#allocation5], %s159
          %s161 = smul.addr %s157, 64
          %s162 = scalar_lea.hbm %s0, %s161
          %s163 = sshll.u32 [#allocation4], 4
          %s164 = int_to_ptr.vmem [resolvable:$true] %s163
          %169 = dma.hbm_to_vmem [thread:$0]  %s162, 1280, %s164, [#allocation5], 256, 256, 16
        $region16: #{tpu_custom_call.1} parent=11 // pred_fallthru
          _
        // Predicated region
        $region17: #{tpu_custom_call.1} parent=11 // pred_check
          %p170 = pneg %p71
        $region18: #{tpu_custom_call.1} parent=11 // pred_check_branch
          %172 = sbr.rel (%p170) target = $region20
        $region19: #{tpu_custom_call.1} parent=11 // pred_region
          _
        $region20: #{tpu_custom_call.1} parent=11 // pred_fallthru
          _
        // Predicated region
        $region21: #{tpu_custom_call.1} parent=11 // pred_check
          %p173 = pneg %p92
        $region22: #{tpu_custom_call.1} parent=11 // pred_check_branch
          %175 = sbr.rel (%p173) target = $region24
        $region23: #{tpu_custom_call.1} parent=11 // pred_region
          _
        $region24: #{tpu_custom_call.1} parent=11 // pred_fallthru
          _
        // Predicated region
        $region25: #{tpu_custom_call.1} parent=11 // pred_check
          %p176 = pneg %p113
        $region26: #{tpu_custom_call.1} parent=11 // pred_check_branch
          %178 = sbr.rel (%p176) target = $region28
        $region27: #{tpu_custom_call.1} parent=11 // pred_region
          _
        $region28: #{tpu_custom_call.1} parent=11 // pred_fallthru
          _
      $region12: #{tpu_custom_call.1} parent=5 // pred_fallthru
        _
      %p179 = scmp.lt.s32.totalorder %s12, 2
      // Predicated region
      $region29: #{tpu_custom_call.1} parent=5 // pred_check
        %p180 = pneg %p179
      $region30: #{tpu_custom_call.1} parent=5 // pred_check_branch
        %182 = sbr.rel (%p180) target = $region32
      $region31: #{tpu_custom_call.1} parent=5 // pred_region
        _
      $region32: #{tpu_custom_call.1} parent=5 // pred_fallthru
        _
      %p183 = scmp.le.s32.totalorder 1, %s12
      %p184 = scmp.lt.s32.totalorder %s12, 3
      %p185 = pnand %p183, %p184
      %p186 = pneg %p185
      // Predicated region
      $region33: #{tpu_custom_call.1} parent=5 // pred_check
        _
      $region34: #{tpu_custom_call.1} parent=5 // pred_check_branch
        %188 = sbr.rel (%p185) target = $region36
      $region35: #{tpu_custom_call.1} parent=5 // pred_region
        %s189 = ssub.s32 %s12, 1
        // Predicated region
        $region37: #{tpu_custom_call.1} parent=35 // pred_check
          %p190 = pneg %p50
        $region38: #{tpu_custom_call.1} parent=35 // pred_check_branch
          %192 = sbr.rel (%p190) target = $region40
        $region39: #{tpu_custom_call.1} parent=35 // pred_region
          %193 = dma.done [#allocation5], 1280
        $region40: #{tpu_custom_call.1} parent=35 // pred_fallthru
          _
        %p194 = pneg %p50
        %p195 = pneg %p47
        %p196 = pneg %p71
        %p197 = pneg %p68
        %p198 = pneg %p92
        %p199 = pneg %p89
        %p200 = pneg %p113
        %p201 = pneg %p110
        %p202 = pneg %p139
        %p203 = pneg %p136
        %s204 = smul.u32 4, %s22
        %s205 = smul.u32 4, %s22
        %v207 = vld [vmem:[%s1] sm:$0xf]
        %v208 = vld [vmem:[#allocation4] sm:$0xff]
        %v209 = vld [vmem:[#allocation4 + $0x8] sm:$0xff]
        %v210 = vld [vmem:[#allocation4 + $0x10] sm:$0xff]
        %v211 = vld [vmem:[#allocation4 + $0x18] sm:$0xff]
        %v212 = vld [vmem:[#allocation4 + $0x20] sm:$0xff]
        %v213 = vld [vmem:[#allocation4 + $0x28] sm:$0xff]
        %v214 = vld [vmem:[#allocation4 + $0x30] sm:$0xff]
        %v215 = vld [vmem:[#allocation4 + $0x38] sm:$0xff]
        %v216 = vld [vmem:[#allocation4 + $0x40] sm:$0x33]
        %v217 = vld [vmem:[#allocation4 + $0x48] sm:$0x33]
        %v228 = vunpack.c.l.b16 %v208
        %v229 = vunpack.c.h.b16 %v208
        %v230 = vunpack.c.l.b16 %v209
        %v231 = vunpack.c.h.b16 %v209
        %v232 = vunpack.c.l.b16 %v210
        %v233 = vunpack.c.h.b16 %v210
        %v234 = vunpack.c.l.b16 %v211
        %v235 = vunpack.c.h.b16 %v211
        %v236 = vunpack.c.l.b16 %v212
        %v237 = vunpack.c.h.b16 %v212
        %v238 = vunpack.c.l.b16 %v213
        %v239 = vunpack.c.h.b16 %v213
        %v240 = vunpack.c.l.b16 %v214
        %v241 = vunpack.c.h.b16 %v214
        %v242 = vunpack.c.l.b16 %v215
        %v243 = vunpack.c.h.b16 %v215
        %v244 = vunpack.c.l.b16 %v216
        %v245 = vunpack.c.h.b16 %v216
        %v246 = vunpack.c.l.b16 %v217
        %v247 = vunpack.c.h.b16 %v217
        %v248 = vpack.c.b16 %v232, %v228
        %v249 = vpack.c.b16 %v233, %v229
        %v250 = vpack.c.b16 %v234, %v230
        %v251 = vpack.c.b16 %v235, %v231
        %v252 = vpack.c.b16 %v240, %v236
        %v253 = vpack.c.b16 %v241, %v237
        %v254 = vpack.c.b16 %v242, %v238
        %v255 = vpack.c.b16 %v243, %v239
        %v256 = vpack.c.b16 %v244, %v244
        %v257 = vpack.c.b16 %v245, %v245
        %v258 = vpack.c.b16 %v246, %v246
        %v259 = vpack.c.b16 %v247, %v247
        %vm268 = vcmask 293888
        %v270 = vsel %vm268, %v207, 0
        %vm272 = vcmask 1041408
        %v274 = vsel %vm272, %v256, 0
        %v277 = vsel %vm272, %v257, 0
        %v280 = vsel %vm272, %v258, 0
        %v283 = vsel %vm272, %v259, 0
        %285 = vmatprep.subr.bf16.mxu0 %v249
        %286 = vmatpush1.bf16.msra.mxu0 %v248
        %287 = vmatprep.subr.bf16.mxu0 %v253
        %288 = vmatpush1.bf16.msra.mxu0 %v252
        %289 = vmatprep.subr.bf16.mxu0 %v277
        %290 = vmatpush1.bf16.msra.mxu0 %v274
        %291 = vmatprep.subr.bf16.mxu0 0
        %292 = vmatpush1.bf16.msra.mxu0 0
        %293 = vmatprep.subr.bf16.mxu0 0
        %294 = vmatpush1.bf16.msra.mxu0 0
        %295 = vmatprep.subr.bf16.mxu0 0
        %296 = vmatpush1.bf16.msra.mxu0 0
        %297 = vmatprep.subr.bf16.mxu0 0
        %298 = vmatpush1.bf16.msra.mxu0 0
        %299 = vmatprep.subr.bf16.mxu0 0
        %300 = vmatpush1.bf16.msra.mxu0 0
        %301 = vmatprep.subr.bf16.mxu0 0
        %302 = vmatpush1.bf16.msra.mxu0 0
        %303 = vmatprep.subr.bf16.mxu0 0
        %304 = vmatpush1.bf16.msra.mxu0 0
        %305 = vmatprep.subr.bf16.mxu0 0
        %306 = vmatpush1.bf16.msra.mxu0 0
        %307 = vmatprep.subr.bf16.mxu0 0
        %308 = vmatpush1.bf16.msra.mxu0 0
        %309 = vmatprep.subr.bf16.mxu0 0
        %310 = vmatpush1.bf16.msra.mxu0 0
        %311 = vmatprep.subr.bf16.mxu0 0
        %312 = vmatpush1.bf16.msra.mxu0 0
        %313 = vmatprep.subr.bf16.mxu0 0
        %314 = vmatpush1.bf16.msra.mxu0 0
        %315 = vmatprep.subr.bf16.mxu0 0
        %316 = vmatpush1.bf16.msra.mxu0 0
        %317 = vmatprep.mubr.bf16.mxu0 0
        %318 = vmatmul.mubr.bf16.gmra.mrb[0].mxu0 %v270
        %v319 = vpop.f32.mrb[0].mxu0
        %v320 = vadd.f32 0.0, %v319
        %v321 = vpop.f32.mrb[0].mxu0
        %v322 = vadd.f32 0.0, %v321
        %v323 = vpop.f32.mrb[0].mxu0
        %v324 = vpop.f32.mrb[0].mxu0
        %325 = vdwg.mxu0
        %326 = vmatprep.subr.bf16.mxu0 %v251
        %327 = vmatpush1.bf16.msra.mxu0 %v250
        %328 = vmatprep.subr.bf16.mxu0 %v255
        %329 = vmatpush1.bf16.msra.mxu0 %v254
        %330 = vmatprep.subr.bf16.mxu0 %v283
        %331 = vmatpush1.bf16.msra.mxu0 %v280
        %332 = vmatprep.subr.bf16.mxu0 0
        %333 = vmatpush1.bf16.msra.mxu0 0
        %334 = vmatprep.subr.bf16.mxu0 0
        %335 = vmatpush1.bf16.msra.mxu0 0
        %336 = vmatprep.subr.bf16.mxu0 0
        %337 = vmatpush1.bf16.msra.mxu0 0
        %338 = vmatprep.subr.bf16.mxu0 0
        %339 = vmatpush1.bf16.msra.mxu0 0
        %340 = vmatprep.subr.bf16.mxu0 0
        %341 = vmatpush1.bf16.msra.mxu0 0
        %342 = vmatprep.subr.bf16.mxu0 0
        %343 = vmatpush1.bf16.msra.mxu0 0
        %344 = vmatprep.subr.bf16.mxu0 0
        %345 = vmatpush1.bf16.msra.mxu0 0
        %346 = vmatprep.subr.bf16.mxu0 0
        %347 = vmatpush1.bf16.msra.mxu0 0
        %348 = vmatprep.subr.bf16.mxu0 0
        %349 = vmatpush1.bf16.msra.mxu0 0
        %350 = vmatprep.subr.bf16.mxu0 0
        %351 = vmatpush1.bf16.msra.mxu0 0
        %352 = vmatprep.subr.bf16.mxu0 0
        %353 = vmatpush1.bf16.msra.mxu0 0
        %354 = vmatprep.subr.bf16.mxu0 0
        %355 = vmatpush1.bf16.msra.mxu0 0
        %356 = vmatprep.subr.bf16.mxu0 0
        %357 = vmatpush1.bf16.msra.mxu0 0
        %358 = vmatprep.mubr.bf16.mxu0 0
        %359 = vmatmul.mubr.bf16.gmra.mrb[0].mxu0 %v270
        %v360 = vpop.f32.mrb[0].mxu0
        %v361 = vadd.f32 0.0, %v360
        %v362 = vpop.f32.mrb[0].mxu0
        %v363 = vadd.f32 0.0, %v362
        %v364 = vpop.f32.mrb[0].mxu0
        %v365 = vpop.f32.mrb[0].mxu0
        %366 = vdwg.mxu0
        %p367 = scmp.eq.s32.totalorder %s21, 0
        %p368 = scmp.eq.s32.totalorder %s22, 0
        %p369 = pnand %p367, %p368
        %p370 = pneg %p369
        // Predicated region
        $region41: #{tpu_custom_call.1} parent=35 // pred_check
          _
        $region42: #{tpu_custom_call.1} parent=35 // pred_check_branch
          %372 = sbr.rel (%p369) target = $region44
        $region43: #{tpu_custom_call.1} parent=35 // pred_region
          %vm373 = vcmask 7168
          %374 = vst.msk [vmem:[#allocation2] sm:$0xff] %vm373, 0.0
          %375 = vst.msk [vmem:[#allocation3] sm:$0xff] %vm373, 0.0
        $region44: #{tpu_custom_call.1} parent=35 // pred_fallthru
          _
        // Predicated region
        $region45: #{tpu_custom_call.1} parent=35 // pred_check
          %p376 = pneg %p367
        $region46: #{tpu_custom_call.1} parent=35 // pred_check_branch
          %378 = sbr.rel (%p376) target = $region48
        $region47: #{tpu_custom_call.1} parent=35 // pred_region
          %v379 = vld [vmem:[#allocation2] sm:$0xff]
          %v380 = vadd.f32 %v320, %v322
          %v381 = vadd.f32 %v380, %v361
          %v382 = vadd.f32 %v381, %v363
          %383 = vadd.xlane.f32.xlu0 %v382
          %v384 = vpop.xlane.xlu0 %383
          %v385 = vadd.f32 %v379, %v384
          %vm386 = vcmask 7168
          %387 = vst.msk [vmem:[#allocation2] sm:$0xff] %vm386, %v385
          %v388 = vld [vmem:[#allocation3] sm:$0xff]
          %v389 = vmul.f32 %v320, %v320
          %v390 = vmul.f32 %v322, %v322
          %v391 = vmul.f32 %v361, %v361
          %v392 = vmul.f32 %v363, %v363
          %v393 = vadd.f32 %v389, %v390
          %v394 = vadd.f32 %v393, %v391
          %v395 = vadd.f32 %v394, %v392
          %396 = vadd.xlane.f32.xlu0 %v395
          %v397 = vpop.xlane.xlu0 %396
          %v398 = vadd.f32 %v388, %v397
          %399 = vst.msk [vmem:[#allocation3] sm:$0xff] %vm386, %v398
          %400 = vst [vmem:[#allocation7] sm:$0xff] %v320
          %401 = vst [vmem:[#allocation7 + $0x8] sm:$0xff] %v322
          %402 = vst [vmem:[#allocation7 + $0x10] sm:$0xff] %v361
          %403 = vst [vmem:[#allocation7 + $0x18] sm:$0xff] %v363
        $region48: #{tpu_custom_call.1} parent=35 // pred_fallthru
          _
        %p404 = scmp.eq.s32.totalorder %s21, 1
        // Predicated region
        $region49: #{tpu_custom_call.1} parent=35 // pred_check
          %p405 = pneg %p404
        $region50: #{tpu_custom_call.1} parent=35 // pred_check_branch
          %407 = sbr.rel (%p405) target = $region52
        $region51: #{tpu_custom_call.1} parent=35 // pred_region
          %v408 = vld [vmem:[#allocation2] sm:$0xff]
          %v409 = vmul.f32 %v408, 0.001953125
          %v410 = vld [vmem:[#allocation3] sm:$0xff]
          %v411 = vmul.f32 %v410, 0.001953125
          %v412 = vmul.f32 %v409, %v409
          %v413 = vsub.f32 %v411, %v412
          %v414 = vld [vmem:[%s2] sm:$0xff]
          %v415 = vadd.f32 %v413, 1e-05
          %v416 = vrsqrt.pop %v415
          %v417 = vmul.f32 %v414, %v416
          %v418 = vld [vmem:[%s3] sm:$0xff]
          %v419 = vmul.f32 %v409, %v417
          %v420 = vsub.f32 %v418, %v419
          %422 = vset.pattern.permute.xlu0 0
          %423 = vperm.xlu0 %422, %v417
          %v424 = vpop.permute.xlu0 %423
          %v426 = vmul.f32 %v320, %v424
          %v427 = vmul.f32 %v322, %v424
          %v428 = vmul.f32 %v361, %v424
          %v429 = vmul.f32 %v363, %v424
          %431 = vset.pattern.permute.xlu0 0
          %432 = vperm.xlu0 %431, %v420
          %v433 = vpop.permute.xlu0 %432
          %v435 = vadd.f32 %v426, %v433
          %v436 = vadd.f32 %v427, %v433
          %v437 = vadd.f32 %v428, %v433
          %v438 = vadd.f32 %v429, %v433
          %v439 = vmax.f32 %v435, 0.0
          %v440 = vmax.f32 %v436, 0.0
          %v441 = vmax.f32 %v437, 0.0
          %v442 = vmax.f32 %v438, 0.0
          %443 = vst [vmem:[#allocation7] sm:$0xff] %v439
          %444 = vst [vmem:[#allocation7 + $0x8] sm:$0xff] %v440
          %445 = vst [vmem:[#allocation7 + $0x10] sm:$0xff] %v441
          %446 = vst [vmem:[#allocation7 + $0x18] sm:$0xff] %v442
        $region52: #{tpu_custom_call.1} parent=35 // pred_fallthru
          _
        // Predicated region
        $region53: #{tpu_custom_call.1} parent=35 // pred_check
          %p447 = pneg %p136
        $region54: #{tpu_custom_call.1} parent=35 // pred_check_branch
          %449 = sbr.rel (%p447) target = $region56
        $region55: #{tpu_custom_call.1} parent=35 // pred_region
          %s450 = smul.u32 4, %s22
          %s452 = ssub.s32 512, 512
          %453 = vsyncadd [#allocation6], %s452
          %s454 = smul.addr %s450, 128
          %s455 = scalar_lea.hbm %s4, %s454
          %s457 = sshll.u32 [#allocation7], 4
          %s458 = int_to_ptr.vmem [resolvable:$true] %s457
          %460 = dma.vmem_to_hbm [thread:$0]  %s458, 512, %s455, [#allocation6]
        $region56: #{tpu_custom_call.1} parent=35 // pred_fallthru
          _
        // Predicated region
        $region57: #{tpu_custom_call.1} parent=35 // pred_check
          %p461 = pneg %p136
        $region58: #{tpu_custom_call.1} parent=35 // pred_check_branch
          %463 = sbr.rel (%p461) target = $region60
        $region59: #{tpu_custom_call.1} parent=35 // pred_region
          %464 = dma.done [#allocation6], 512
        $region60: #{tpu_custom_call.1} parent=35 // pred_fallthru
          _
      $region36: #{tpu_custom_call.1} parent=5 // pred_fallthru
        _
      %p465 = scmp.le.s32.totalorder 2, %s12
      // Predicated region
      $region61: #{tpu_custom_call.1} parent=5 // pred_check
        %p466 = pneg %p465
      $region62: #{tpu_custom_call.1} parent=5 // pred_check_branch
        %468 = sbr.rel (%p466) target = $region64
      $region63: #{tpu_custom_call.1} parent=5 // pred_region
        %s469 = ssub.s32 %s12, 2
      $region64: #{tpu_custom_call.1} parent=5 // pred_fallthru
        _
    $region6: #{tpu_custom_call.1} parent=1 // loop_footer
      %s16 = sadd.s32 1, %s12
    $region7: #{tpu_custom_call.1} parent=1 // loop_footer_branch
      %11 = sbr.rel target = $region3
    $region8: #{tpu_custom_call.1} parent=1 // loop_exit
      _
    %470 = vsyncpa [#allocation5], 1
    %s471 = scalar_lea.sflag [#allocation5], 1
    %472 = vsyncpa %s471, 1
    %473 = vsyncpa [#allocation6], 1
    %s474 = scalar_lea.sflag [#allocation6], 1
    %475 = vsyncpa %s474, 1

</llo_original>
